<compile_context>
chip_gen: v6e
topology: v6e:2x2x1
jax: 0.10.0
libtpu: 0.0.40
codegen_flags: <defaults>
</compile_context>

<pallas_src>
import functools

import jax
import jax.numpy as jnp
from jax import lax
from jax.experimental import pallas as pl
from jax.experimental.pallas import tpu as pltpu


def _down_kernel(p_ref, w_ref, b_ref, a_ref, o_ref, *, small_c, use_bf16):
    # p_ref: (1, C, TP)        pooled pixels, channels on sublanes, pixels on lanes
    # w_ref: (2C, C) or (C, 2C, 1)  1x1 conv weight, resident across the grid
    # b_ref: (2C, 1)           conv bias column (broadcast over lanes)
    # a_ref: (1, 1) SMEM       PReLU shared parameter (num_parameters=1)
    # o_ref: (1, 2C, TP)       lane-dense output, reshapes directly to NCHW
    pooled = p_ref[0]                                   # (C, TP)
    if small_c:
        # C <= 8: MXU K-fill would be tiny; do 2C*C VPU multiply-adds over whole
        # (2C, TP) vregs instead.  w_ref[c] is a (2C, 1) column (lane broadcast),
        # pooled[c:c+1, :] is a (1, TP) row (sublane broadcast).
        C = pooled.shape[0]
        y = b_ref[...] + w_ref[0] * pooled[0:1, :]
        for c in range(1, C):
            y = y + w_ref[c] * pooled[c:c + 1, :]
    else:
        rhs = pooled
        if use_bf16:
            rhs = rhs.astype(jnp.bfloat16)              # weight already bf16
        y = jnp.dot(w_ref[...], rhs,
                    preferred_element_type=jnp.float32)  # (2C, TP) on MXU
        y = y + b_ref[...]
    alpha = a_ref[0, 0]                                 # scalar from SMEM
    y = jnp.where(y > 0, y, alpha * y)                  # PReLU
    o_ref[0] = y.astype(o_ref.dtype)


def _choose_tp(P, C, itemsize, n_parallel):
    """Pick the P-tile width (multiple of 128 lanes, or full P).

    ~2 MiB of input tile (C*TP elements): with the 2x-larger output tile and
    double buffering the pipelined footprint is ~6x that (~12 MiB) -- safe on
    v7x's 64 MiB VMEM yet large enough to sit on the HBM-roofline plateau on
    v5e/v6e.
    """
    budget = 2 * 1024 * 1024
    tp = budget // (C * itemsize)
    tp = max(128, min(8192, (tp // 128) * 128))
    if P <= tp:
        tp_sel, npt = P, 1
    else:
        # Prefer an exact divisor, but never collapse to tiny tiles (review:
        # 128-lane tiles reach ~29% of HBM roofline vs 85%+ at 512-1024).  One
        # ragged last tile (masked store) is far cheaper than shrinking all tiles.
        tp_sel, npt = tp, pl.cdiv(P, tp)
        min_cand = max(512, tp // 2)
        for cand in range(tp, min_cand - 1, -128):
            if P % cand == 0:
                tp_sel, npt = cand, P // cand
                break
    # v7x has 2 TensorCores: guarantee >= 2 grid steps so a core is never idle.
    if n_parallel * npt < 2 and P >= 256:
        tp_sel = pl.cdiv(pl.cdiv(P, 2), 128) * 128
        npt = pl.cdiv(P, tp_sel)
    return tp_sel, npt


def down_forward(x_nchw, w, b, alpha):
    """x_nchw: (N, C, H, W); w: (2C, C) squeezed 1x1 conv weight; b: (2C,);
    alpha: scalar PReLU parameter.  Returns (N, 2C, H//2, W//2)."""
    N, C, H, W = x_nchw.shape
    Hh, Wh = H // 2, W // 2
    C2 = 2 * C
    P = Hh * Wh

    # nn.MaxPool2d(2) (floor semantics for odd H/W) as one XLA reduce_window:
    # reads the image once, writes the 4x-smaller pooled tensor once.  The
    # follow-up reshape to (N, C, P) is a free contiguous view (no transpose).
    pooled = lax.reduce_window(
        x_nchw, -jnp.inf, lax.max,
        window_dimensions=(1, 1, 2, 2),
        window_strides=(1, 1, 2, 2),
        padding="VALID").reshape(N, C, P)

    small_c = C <= 8
    use_bf16 = (not small_c) and C >= 256 and pooled.dtype == jnp.float32

    if small_c:
        # Per-input-channel weight columns: w_ref[c] -> (2C, 1), no lane slicing.
        w_in = w.astype(pooled.dtype).T.reshape(C, C2, 1)
        w_spec = pl.BlockSpec((C, C2, 1), lambda n, p: (0, 0, 0))
    else:
        w_in = w.astype(jnp.bfloat16 if use_bf16 else pooled.dtype)   # (2C, C)
        w_spec = pl.BlockSpec((C2, C), lambda n, p: (0, 0))

    b_col = b.reshape(C2, 1).astype(jnp.float32)
    a_arr = jnp.reshape(alpha, (1, 1)).astype(jnp.float32)

    itemsize = jnp.dtype(pooled.dtype).itemsize
    out_itemsize = jnp.dtype(x_nchw.dtype).itemsize
    TP, nPT = _choose_tp(P, C, itemsize, N)

    # Explicit VMEM budget: double-buffered input+output tiles + resident
    # weight/bias, with ~2x headroom.  Covers v5e's 16 MiB scoped default and
    # stays far below v7x's 64 MiB physical VMEM.
    tile_bytes = 2 * (C * TP * itemsize + C2 * TP * out_itemsize)
    const_bytes = C2 * C * jnp.dtype(w_in.dtype).itemsize + C2 * 4 + 4096
    vmem_limit = int(min(48 * 2**20,
                         max(16 * 2**20, 2 * (tile_bytes + const_bytes))))

    # Kernel-only cost (the XLA pool op is accounted separately by XLA).
    cost = pl.CostEstimate(
        flops=2 * N * P * C * C2 + 4 * N * P * C2,
        transcendentals=0,
        bytes_accessed=N * P * (C + C2) * itemsize + (C2 * C + C2 + 1) * 4,
    )

    kernel = functools.partial(_down_kernel, small_c=small_c, use_bf16=use_bf16)

    out = pl.pallas_call(
        kernel,
        out_shape=jax.ShapeDtypeStruct((N, C2, P), x_nchw.dtype),
        grid=(N, nPT),                                        # P axis fastest-varying
        in_specs=[
            pl.BlockSpec((1, C, TP), lambda n, p: (n, 0, p)),
            w_spec,                                           # weight resident
            pl.BlockSpec((C2, 1), lambda n, p: (0, 0)),       # bias resident
            pl.BlockSpec(memory_space=pltpu.MemorySpace.SMEM),  # alpha scalar
        ],
        out_specs=pl.BlockSpec((1, C2, TP), lambda n, p: (n, 0, p)),
        compiler_params=pltpu.CompilerParams(
            dimension_semantics=("parallel", "parallel"),
            vmem_limit_bytes=vmem_limit),
        cost_estimate=cost,
    )(pooled, w_in, b_col, a_arr)

    # Note: with a ragged last P tile the out-of-bounds lanes read garbage; those
    # output lanes are masked on store, so this is benign (do not "fix").
    return out.reshape(N, C2, Hh, Wh)                         # already channels-first


def down_reference(x_nchw, w, b, alpha):
    """Pure-JAX reference mirroring the PyTorch forward."""
    N, C, H, W = x_nchw.shape
    xr = x_nchw[:, :, :2 * (H // 2), :2 * (W // 2)]
    xr = xr.reshape(N, C, H // 2, 2, W // 2, 2)
    pooled = jnp.max(jnp.max(xr, axis=5), axis=3)             # (N, C, H/2, W/2)
    y = jnp.einsum("nchw,oc->nohw", pooled, w) + b[None, :, None, None]
    return jnp.where(y > 0, y, alpha * y)


if __name__ == "__main__":
    key = jax.random.PRNGKey(0)
    kx, kw, kb, kx2 = jax.random.split(key, 4)

    N, C, H, W = 2, 4, 16, 16
    C2 = 2 * C

    x = jax.random.normal(kx, (N, C, H, W), dtype=jnp.float32)

    # parameter shapes match nn.Conv2d(C, 2C, 1) (weight squeezed) + nn.PReLU()
    bound = 1.0 / (C ** 0.5)
    w = jax.random.uniform(kw, (C2, C), jnp.float32, -bound, bound)
    b = jax.random.uniform(kb, (C2,), jnp.float32, -bound, bound)
    alpha = jnp.float32(0.25)                                  # PReLU default init

    out = jax.block_until_ready(down_forward(x, w, b, alpha))
    ref = down_reference(x, w, b, alpha)
    assert out.shape == (N, C2, H // 2, W // 2)
    assert jnp.allclose(out, ref, atol=1e-5, rtol=1e-5)

    # odd spatial dims exercise MaxPool2d(2)'s floor semantics
    x_odd = jax.random.normal(kx2, (1, C, 17, 17), dtype=jnp.float32)
    out_odd = jax.block_until_ready(down_forward(x_odd, w, b, alpha))
    assert out_odd.shape == (1, C2, 8, 8)
    assert jnp.allclose(out_odd, down_reference(x_odd, w, b, alpha),
                        atol=1e-5, rtol=1e-5)

    print("KERNEL_OK")
</pallas_src>

<mosaic_0001>
module attributes {stable_mosaic.version = 11 : i64} {
  func.func @_down_kernel(%arg0: i32, %arg1: i32, %arg2: memref<1x4x64xf32, #tpu.memory_space<vmem>>, %arg3: memref<4x8x1xf32, #tpu.memory_space<vmem>>, %arg4: memref<8x1xf32, #tpu.memory_space<vmem>>, %arg5: memref<1x1xf32, #tpu.memory_space<smem>>, %arg6: memref<1x8x64xf32, #tpu.memory_space<vmem>>) attributes {dimension_semantics = [#tpu.dimension_semantics<parallel>, #tpu.dimension_semantics<parallel>], iteration_bounds = array<i64: 2, 1>, scalar_prefetch = 0 : i64, scratch_operands = 0 : i64, tpu.core_type = #tpu.core_type<tc>, window_params = [{transform_indices = @transform_0, window_bounds = array<i64: 1, 4, 64>}, {pipeline_mode = #tpu.pipeline_mode<synchronous>, transform_indices = @transform_1, window_bounds = array<i64: 4, 8, 1>}, {pipeline_mode = #tpu.pipeline_mode<synchronous>, transform_indices = @transform_2, window_bounds = array<i64: 8, 1>}, {transform_indices = @transform_3, window_bounds = array<i64: 1, 1>}, {transform_indices = @transform_4, window_bounds = array<i64: 1, 8, 64>}]} {
    %c0 = arith.constant 0 : index
    %c0_0 = arith.constant 0 : index
    %c0_1 = arith.constant 0 : index
    %0 = vector.load %arg2[%c0, %c0_0, %c0_1] : memref<1x4x64xf32, #tpu.memory_space<vmem>>, vector<1x4x64xf32>
    %1 = vector.shape_cast %0 : vector<1x4x64xf32> to vector<4x64xf32>
    %c0_2 = arith.constant 0 : index
    %c0_3 = arith.constant 0 : index
    %2 = vector.load %arg4[%c0_2, %c0_3] : memref<8x1xf32, #tpu.memory_space<vmem>>, vector<8x1xf32>
    %c0_4 = arith.constant 0 : index
    %c0_5 = arith.constant 0 : index
    %c0_6 = arith.constant 0 : index
    %3 = vector.load %arg3[%c0_4, %c0_5, %c0_6] : memref<4x8x1xf32, #tpu.memory_space<vmem>>, vector<1x8x1xf32>
    %4 = vector.shape_cast %3 : vector<1x8x1xf32> to vector<8x1xf32>
    %5 = vector.extract_strided_slice %1 {offsets = [0, 0], sizes = [1, 64], strides = [1, 1]} : vector<4x64xf32> to vector<1x64xf32>
    %6 = vector.broadcast %4 : vector<8x1xf32> to vector<8x64xf32>
    %7 = vector.broadcast %5 : vector<1x64xf32> to vector<8x64xf32>
    %8 = arith.mulf %6, %7 : vector<8x64xf32>
    %9 = vector.broadcast %2 : vector<8x1xf32> to vector<8x64xf32>
    %10 = arith.addf %9, %8 : vector<8x64xf32>
    %c1 = arith.constant 1 : index
    %c0_7 = arith.constant 0 : index
    %c0_8 = arith.constant 0 : index
    %11 = vector.load %arg3[%c1, %c0_7, %c0_8] : memref<4x8x1xf32, #tpu.memory_space<vmem>>, vector<1x8x1xf32>
    %12 = vector.shape_cast %11 : vector<1x8x1xf32> to vector<8x1xf32>
    %13 = vector.extract_strided_slice %1 {offsets = [1, 0], sizes = [1, 64], strides = [1, 1]} : vector<4x64xf32> to vector<1x64xf32>
    %14 = vector.broadcast %12 : vector<8x1xf32> to vector<8x64xf32>
    %15 = vector.broadcast %13 : vector<1x64xf32> to vector<8x64xf32>
    %16 = arith.mulf %14, %15 : vector<8x64xf32>
    %17 = arith.addf %10, %16 : vector<8x64xf32>
    %c2 = arith.constant 2 : index
    %c0_9 = arith.constant 0 : index
    %c0_10 = arith.constant 0 : index
    %18 = vector.load %arg3[%c2, %c0_9, %c0_10] : memref<4x8x1xf32, #tpu.memory_space<vmem>>, vector<1x8x1xf32>
    %19 = vector.shape_cast %18 : vector<1x8x1xf32> to vector<8x1xf32>
    %20 = vector.extract_strided_slice %1 {offsets = [2, 0], sizes = [1, 64], strides = [1, 1]} : vector<4x64xf32> to vector<1x64xf32>
    %21 = vector.broadcast %19 : vector<8x1xf32> to vector<8x64xf32>
    %22 = vector.broadcast %20 : vector<1x64xf32> to vector<8x64xf32>
    %23 = arith.mulf %21, %22 : vector<8x64xf32>
    %24 = arith.addf %17, %23 : vector<8x64xf32>
    %c3 = arith.constant 3 : index
    %c0_11 = arith.constant 0 : index
    %c0_12 = arith.constant 0 : index
    %25 = vector.load %arg3[%c3, %c0_11, %c0_12] : memref<4x8x1xf32, #tpu.memory_space<vmem>>, vector<1x8x1xf32>
    %26 = vector.shape_cast %25 : vector<1x8x1xf32> to vector<8x1xf32>
    %27 = vector.extract_strided_slice %1 {offsets = [3, 0], sizes = [1, 64], strides = [1, 1]} : vector<4x64xf32> to vector<1x64xf32>
    %28 = vector.broadcast %26 : vector<8x1xf32> to vector<8x64xf32>
    %29 = vector.broadcast %27 : vector<1x64xf32> to vector<8x64xf32>
    %30 = arith.mulf %28, %29 : vector<8x64xf32>
    %31 = arith.addf %24, %30 : vector<8x64xf32>
    %c0_13 = arith.constant 0 : index
    %c0_14 = arith.constant 0 : index
    %32 = memref.load %arg5[%c0_13, %c0_14] : memref<1x1xf32, #tpu.memory_space<smem>>
    %cst = arith.constant 0.000000e+00 : f32
    %33 = vector.broadcast %cst : f32 to vector<8x64xf32>
    %34 = arith.cmpf ogt, %31, %33 : vector<8x64xf32>
    %35 = vector.broadcast %32 : f32 to vector<8x64xf32>
    %36 = arith.mulf %35, %31 : vector<8x64xf32>
    %37 = arith.select %34, %31, %36 : vector<8x64xi1>, vector<8x64xf32>
    %c0_15 = arith.constant 0 : index
    %c0_16 = arith.constant 0 : index
    %c0_17 = arith.constant 0 : index
    %38 = vector.load %arg6[%c0_15, %c0_16, %c0_17] : memref<1x8x64xf32, #tpu.memory_space<vmem>>, vector<1x8x64xf32>
    %39 = vector.shape_cast %38 : vector<1x8x64xf32> to vector<8x64xf32>
    %40 = vector.shape_cast %37 : vector<8x64xf32> to vector<1x8x64xf32>
    tpu.vector_store %arg6[%c0_15, %c0_16, %c0_17], %40 {strides = array<i32>} : memref<1x8x64xf32, #tpu.memory_space<vmem>>, vector<1x8x64xf32>,
    return
  }
  func.func @transform_0(%arg0: i32, %arg1: i32) -> (i32, i32, i32) {
    %c0_i32 = arith.constant 0 : i32
    %c0_i32_0 = arith.constant 0 : i32
    return %arg0, %c0_i32, %arg1 : i32, i32, i32
  }
  func.func @transform_1(%arg0: i32, %arg1: i32) -> (i32, i32, i32) {
    %c0_i32 = arith.constant 0 : i32
    %c0_i32_0 = arith.constant 0 : i32
    %c0_i32_1 = arith.constant 0 : i32
    %c0_i32_2 = arith.constant 0 : i32
    return %c0_i32, %c0_i32_0, %c0_i32_1 : i32, i32, i32
  }
  func.func @transform_2(%arg0: i32, %arg1: i32) -> (i32, i32) {
    %c0_i32 = arith.constant 0 : i32
    %c0_i32_0 = arith.constant 0 : i32
    %c0_i32_1 = arith.constant 0 : i32
    return %c0_i32, %c0_i32_0 : i32, i32
  }
  func.func @transform_3(%arg0: i32, %arg1: i32) -> (i32, i32) {
    %c0_i32 = arith.constant 0 : i32
    %c0_i32_0 = arith.constant 0 : i32
    %c0_i32_1 = arith.constant 0 : i32
    return %c0_i32, %c0_i32_0 : i32, i32
  }
  func.func @transform_4(%arg0: i32, %arg1: i32) -> (i32, i32, i32) {
    %c0_i32 = arith.constant 0 : i32
    %c0_i32_0 = arith.constant 0 : i32
    return %arg0, %c0_i32, %arg1 : i32, i32, i32
  }
}

</mosaic_0001>

<llo_original>
// kernel: tpu_custom_call.1
$region0: #{tpu_custom_call.1}
  #allocation0 [shape = 'u32[]', space=smem, size = 0x4, offset = 0x4, fixed_abs, tag = 'smem constant byte address 0x4 - core index']
  #allocation1 [shape = 'u32[144,128]{1,0:T(1,128)}', space=vmem, size = 0x12000, scoped, tag = 'internal scratch']
  #allocation2 [shape = 'f32[1,1]{1,0:T(1,128)S(6)}', space=smem, size = 0x200, scoped, tag = 'scoped memory for tpu_custom_call.1']
  %s0 = inlined_call_operand.vmem [shape: f32[2,4,64], index: 0, kind: input, shape index: {}]
  %s1 = inlined_call_operand.vmem [shape: f32[4,8,1], index: 1, kind: input, shape index: {}]
  %s2 = inlined_call_operand.vmem [shape: f32[8,1], index: 2, kind: input, shape index: {}]
  %s3 = inlined_call_operand.<no memory space> [shape: f32[1,1], index: 3, kind: input, shape index: {}]
  %s4 = inlined_call_operand.hbm [shape: f32[2,8,64], index: 4, kind: output, shape index: {}]
  %s5 = sld [smem:[#allocation0]]
  $region49: #{tpu_custom_call.1} parent=0
    _
  %s7 = ssub.s32 1, %s5
  %s8 = scalar_select 0, %s7, %s5
  %9 = sst [smem:[#allocation2]] %s3
  $region1: #{tpu_custom_call.1} parent=0
    #allocation3 [shape = 'u8[8192]{0}', space=vmem, size = 0x2000, scoped, tag = 'output window, operand 0']
    #allocation4 [shape = 's32[2]{0}', space=sflag, size = 0x8, scoped, tag = 'scoped memory for tpu_custom_call.1']
    %10 = vsyncpa [#allocation4], 0
    %s11 = scalar_lea.sflag [#allocation4], 1
    %12 = vsyncpa %s11, 0
    loop: start=0, step=1, limit=4
    $region2: #{tpu_custom_call.1} parent=1 // loop_pre_header
      _
    $region3: #{tpu_custom_call.1} parent=1 // loop_header
      %s14 = sphi 0, %s18
      %p15 = scmp.ge.s32.totalorder %s14, 4
      %s21 = sphi 0, %s33
      %s22 = sphi 0, %s29
      %s23 = sphi 0, %s21
      %s24 = sphi 0, %s22
      %s25 = sphi 0, %s23
      %s26 = sphi 0, %s24
      %s38 = sphi 0, %s40
      %s41 = sphi 0, %s38
      %s42 = sphi 0, %s41
      %s58 = sphi 0, %s42
      %s62 = sphi 0, %s62
      %s64 = sphi 0, %s62
      %s65 = sphi 0, %s64
      %s79 = sphi 0, %s65
      %s83 = sphi 0, %s83
      %s85 = sphi 0, %s83
      %s86 = sphi 0, %s85
      %s100 = sphi 0, %s86
      %s104 = sphi 0, %s104
      %s106 = sphi 0, %s104
      %s107 = sphi 0, %s106
      %s121 = sphi 0, %s107
      %s129 = sphi 0, %s131
      %s132 = sphi 0, %s129
      %s133 = sphi 0, %s132
      %s149 = sphi 0, %s133
    $region4: #{tpu_custom_call.1} parent=1 // loop_header_branch
      %17 = sbr.rel (%p15) target = $region8
    $region5: #{tpu_custom_call.1} parent=1 // loop_body
      %s19 = ssub.s32 %s14, 1
      %s20 = ssub.s32 %s14, 2
      %s27 = sadd.s32 1, %s22
      %p28 = scmp.ge.s32.totalorder %s27, 1
      %s29 = scalar_select %p28, 0, %s27
      %s30 = sadd.s32 1, %s21
      %s31 = scalar_select %p28, %s30, %s21
      %p32 = scmp.ge.s32.totalorder %s31, 2
      %s33 = scalar_select %p32, 0, %s31
      %s34 = ssub.s32 %s21, %s33
      %s35 = ssub.s32 %s22, %s29
      %s36 = sor.u32 %s34, %s35
      %p37 = scmp.eq.s32.totalorder %s36, 0
      %s39 = sadd.s32 %s38, 1
      %s40 = scalar_select %p37, %s38, %s39
      %p43 = pneg %p37
      %p44 = scmp.eq.s32.totalorder %s14, 1
      %p45 = por %p43, %p44
      %p46 = scmp.ne.s32.totalorder %s38, %s41
      %p47 = scmp.eq.s32.totalorder %s14, 0
      %p48 = por %p46, %p47
      %p49 = scmp.ne.s32.totalorder %s38, %s41
      %p50 = scmp.eq.s32.totalorder %s19, 1
      %p51 = por %p49, %p50
      %p52 = scmp.ne.s32.totalorder %s41, %s42
      %p53 = scmp.eq.s32.totalorder %s19, 0
      %p54 = por %p52, %p53
      %p55 = scmp.ne.s32.totalorder %s41, %s42
      %p56 = scmp.eq.s32.totalorder %s20, 1
      %p57 = por %p55, %p56
      %p59 = scmp.ne.s32.totalorder %s42, %s58
      %p60 = scmp.eq.s32.totalorder %s20, 0
      %p61 = por %p59, %p60
      %s63 = sadd.s32 %s62, 1
      %p66 = scmp.eq.s32.totalorder %s14, 1
      %p67 = scmp.ne.s32.totalorder %s62, %s64
      %p68 = scmp.eq.s32.totalorder %s14, 0
      %p69 = por %p67, %p68
      %p70 = scmp.ne.s32.totalorder %s62, %s64
      %p71 = scmp.eq.s32.totalorder %s19, 1
      %p72 = por %p70, %p71
      %p73 = scmp.ne.s32.totalorder %s64, %s65
      %p74 = scmp.eq.s32.totalorder %s19, 0
      %p75 = por %p73, %p74
      %p76 = scmp.ne.s32.totalorder %s64, %s65
      %p77 = scmp.eq.s32.totalorder %s20, 1
      %p78 = por %p76, %p77
      %p80 = scmp.ne.s32.totalorder %s65, %s79
      %p81 = scmp.eq.s32.totalorder %s20, 0
      %p82 = por %p80, %p81
      %s84 = sadd.s32 %s83, 1
      %p87 = scmp.eq.s32.totalorder %s14, 1
      %p88 = scmp.ne.s32.totalorder %s83, %s85
      %p89 = scmp.eq.s32.totalorder %s14, 0
      %p90 = por %p88, %p89
      %p91 = scmp.ne.s32.totalorder %s83, %s85
      %p92 = scmp.eq.s32.totalorder %s19, 1
      %p93 = por %p91, %p92
      %p94 = scmp.ne.s32.totalorder %s85, %s86
      %p95 = scmp.eq.s32.totalorder %s19, 0
      %p96 = por %p94, %p95
      %p97 = scmp.ne.s32.totalorder %s85, %s86
      %p98 = scmp.eq.s32.totalorder %s20, 1
      %p99 = por %p97, %p98
      %p101 = scmp.ne.s32.totalorder %s86, %s100
      %p102 = scmp.eq.s32.totalorder %s20, 0
      %p103 = por %p101, %p102
      %s105 = sadd.s32 %s104, 1
      %p108 = scmp.eq.s32.totalorder %s14, 1
      %p109 = scmp.ne.s32.totalorder %s104, %s106
      %p110 = scmp.eq.s32.totalorder %s14, 0
      %p111 = por %p109, %p110
      %p112 = scmp.ne.s32.totalorder %s104, %s106
      %p113 = scmp.eq.s32.totalorder %s19, 1
      %p114 = por %p112, %p113
      %p115 = scmp.ne.s32.totalorder %s106, %s107
      %p116 = scmp.eq.s32.totalorder %s19, 0
      %p117 = por %p115, %p116
      %p118 = scmp.ne.s32.totalorder %s106, %s107
      %p119 = scmp.eq.s32.totalorder %s20, 1
      %p120 = por %p118, %p119
      %p122 = scmp.ne.s32.totalorder %s107, %s121
      %p123 = scmp.eq.s32.totalorder %s20, 0
      %p124 = por %p122, %p123
      %s125 = ssub.s32 %s21, %s33
      %s126 = ssub.s32 %s22, %s29
      %s127 = sor.u32 %s125, %s126
      %p128 = scmp.eq.s32.totalorder %s127, 0
      %s130 = sadd.s32 %s129, 1
      %s131 = scalar_select %p128, %s129, %s130
      %p134 = pneg %p128
      %p135 = scmp.eq.s32.totalorder %s14, 1
      %p136 = por %p134, %p135
      %p137 = scmp.ne.s32.totalorder %s129, %s132
      %p138 = scmp.eq.s32.totalorder %s14, 0
      %p139 = por %p137, %p138
      %p140 = scmp.ne.s32.totalorder %s129, %s132
      %p141 = scmp.eq.s32.totalorder %s19, 1
      %p142 = por %p140, %p141
      %p143 = scmp.ne.s32.totalorder %s132, %s133
      %p144 = scmp.eq.s32.totalorder %s19, 0
      %p145 = por %p143, %p144
      %p146 = scmp.ne.s32.totalorder %s132, %s133
      %p147 = scmp.eq.s32.totalorder %s20, 1
      %p148 = por %p146, %p147
      %p150 = scmp.ne.s32.totalorder %s133, %s149
      %p151 = scmp.eq.s32.totalorder %s20, 0
      %p152 = por %p150, %p151
      %p153 = scmp.le.s32.totalorder 1, %s14
      %p154 = scmp.lt.s32.totalorder %s14, 3
      %p155 = pnand %p153, %p154
      %p156 = pneg %p155
      // Predicated region
      $region9: #{tpu_custom_call.1} parent=5 // pred_check
        _
      $region10: #{tpu_custom_call.1} parent=5 // pred_check_branch
        %158 = sbr.rel (%p155) target = $region12
      $region11: #{tpu_custom_call.1} parent=5 // pred_region
        %s159 = ssub.s32 %s14, 1
        // Predicated region
        $region13: #{tpu_custom_call.1} parent=11 // pred_check
          %p160 = pneg %p75
        $region14: #{tpu_custom_call.1} parent=11 // pred_check_branch
          %162 = sbr.rel (%p160) target = $region16
        $region15: #{tpu_custom_call.1} parent=11 // pred_region
          _
        $region16: #{tpu_custom_call.1} parent=11 // pred_fallthru
          _
        // Predicated region
        $region17: #{tpu_custom_call.1} parent=11 // pred_check
          %p163 = pneg %p96
        $region18: #{tpu_custom_call.1} parent=11 // pred_check_branch
          %165 = sbr.rel (%p163) target = $region20
        $region19: #{tpu_custom_call.1} parent=11 // pred_region
          _
        $region20: #{tpu_custom_call.1} parent=11 // pred_fallthru
          _
        // Predicated region
        $region21: #{tpu_custom_call.1} parent=11 // pred_check
          %p166 = pneg %p117
        $region22: #{tpu_custom_call.1} parent=11 // pred_check_branch
          %168 = sbr.rel (%p166) target = $region24
        $region23: #{tpu_custom_call.1} parent=11 // pred_region
          _
        $region24: #{tpu_custom_call.1} parent=11 // pred_fallthru
          _
      $region12: #{tpu_custom_call.1} parent=5 // pred_fallthru
        _
      %p169 = scmp.lt.s32.totalorder %s14, 2
      // Predicated region
      $region25: #{tpu_custom_call.1} parent=5 // pred_check
        %p170 = pneg %p169
      $region26: #{tpu_custom_call.1} parent=5 // pred_check_branch
        %172 = sbr.rel (%p170) target = $region28
      $region27: #{tpu_custom_call.1} parent=5 // pred_region
        // Predicated region
        $region29: #{tpu_custom_call.1} parent=27 // pred_check
          %p173 = pneg %p48
        $region30: #{tpu_custom_call.1} parent=27 // pred_check_branch
          %175 = sbr.rel (%p173) target = $region32
        $region31: #{tpu_custom_call.1} parent=27 // pred_region
          %p176 = scmp.lt.s32.totalorder %s21, 1
          %s177 = scalar_select %p176, %s21, 1
          %p178 = scmp.lt.s32.totalorder %s22, 0
          %s179 = scalar_select %p178, %s22, 0
          %s180 = sadd.s32 %s179, %s177
          %s181 = smul.addr %s180, 4
          %s182 = scalar_lea.vmem %s0, %s181
        $region32: #{tpu_custom_call.1} parent=27 // pred_fallthru
          _
      $region28: #{tpu_custom_call.1} parent=5 // pred_fallthru
        _
      %p183 = scmp.le.s32.totalorder 1, %s14
      %p184 = scmp.lt.s32.totalorder %s14, 3
      %p185 = pnand %p183, %p184
      %p186 = pneg %p185
      // Predicated region
      $region33: #{tpu_custom_call.1} parent=5 // pred_check
        _
      $region34: #{tpu_custom_call.1} parent=5 // pred_check_branch
        %188 = sbr.rel (%p185) target = $region36
      $region35: #{tpu_custom_call.1} parent=5 // pred_region
        %s189 = ssub.s32 %s14, 1
        %p190 = scmp.lt.s32.totalorder %s23, 1
        %s191 = scalar_select %p190, %s23, 1
        %p192 = scmp.lt.s32.totalorder %s24, 0
        %s193 = scalar_select %p192, %s24, 0
        %s194 = sadd.s32 %s193, %s191
        %s195 = smul.addr %s194, 4
        %s196 = scalar_lea.vmem %s0, %s195
        %p197 = pneg %p54
        %p198 = pneg %p51
        %p199 = pneg %p75
        %p200 = pneg %p72
        %p201 = pneg %p96
        %p202 = pneg %p93
        %p203 = pneg %p117
        %p204 = pneg %p114
        %p205 = pneg %p145
        %p206 = pneg %p142
        %s207 = sand.u32 %s132, 1
        %s208 = scalar_lea.sflag [#allocation4], %s207
        %s209 = sand.u32 %s132, 1
        %s210 = smul.addr %s209, 8
        %s211 = scalar_lea.vmem [#allocation3], %s210
        %p212 = scmp.lt.s32.totalorder %s23, 1
        %s213 = scalar_select %p212, %s23, 1
        %p214 = scmp.lt.s32.totalorder %s24, 0
        %s215 = scalar_select %p214, %s24, 0
        %s216 = sadd.s32 %s215, %s213
        %s217 = smul.addr %s216, 4
        %s218 = scalar_lea.vmem %s0, %s217
        %v219 = vld [vmem:[%s218] sm:$0xf]
        %v220 = vld [vmem:[%s2] sm:$0xff]
        %v221 = vld [vmem:[%s1] sm:$0xff]
        %223 = vset.pattern.permute.xlu0 0
        %224 = vperm.xlu0 %223, %v221
        %v225 = vpop.permute.xlu0 %224
        %v227 = vlaneseq
        %v228 = vshrl.u32 %v227, 7
        %v229 = vsub.s32 0, %v228
        %v230 = vrot.slane %v219, %v229
        %v231 = vmul.f32 %v225, %v230
        %233 = vset.pattern.permute.xlu0 0
        %234 = vperm.xlu0 %233, %v220
        %v235 = vpop.permute.xlu0 %234
        %v237 = vadd.f32 %v235, %v231
        %s238 = scalar_lea.vmem %s1, 8
        %v239 = vld [vmem:[%s238] sm:$0xff]
        %241 = vset.pattern.permute.xlu0 0
        %242 = vperm.xlu0 %241, %v239
        %v243 = vpop.permute.xlu0 %242
        %v245 = vlaneseq
        %v246 = vshrl.u32 %v245, 7
        %v247 = vsub.s32 1, %v246
        %v248 = vrot.slane %v219, %v247
        %v249 = vmul.f32 %v243, %v248
        %v250 = vadd.f32 %v237, %v249
        %s251 = scalar_lea.vmem %s1, 16
        %v252 = vld [vmem:[%s251] sm:$0xff]
        %254 = vset.pattern.permute.xlu0 0
        %255 = vperm.xlu0 %254, %v252
        %v256 = vpop.permute.xlu0 %255
        %v258 = vlaneseq
        %v259 = vshrl.u32 %v258, 7
        %v260 = vsub.s32 2, %v259
        %v261 = vrot.slane %v219, %v260
        %v262 = vmul.f32 %v256, %v261
        %v263 = vadd.f32 %v250, %v262
        %s264 = scalar_lea.vmem %s1, 24
        %v265 = vld [vmem:[%s264] sm:$0xff]
        %267 = vset.pattern.permute.xlu0 0
        %268 = vperm.xlu0 %267, %v265
        %v269 = vpop.permute.xlu0 %268
        %v271 = vlaneseq
        %v272 = vshrl.u32 %v271, 7
        %v273 = vsub.s32 3, %v272
        %v274 = vrot.slane %v219, %v273
        %v275 = vmul.f32 %v269, %v274
        %v276 = vadd.f32 %v263, %v275
        %s277 = sld [smem:[#allocation2]]
        %vm278 = vcmp.gt.f32.partialorder %v276, 0.0
        %v279 = vstv %s277
        %v280 = vmul.f32 %v279, %v276
        %v281 = vsel %vm278, %v276, %v280
        %vm282 = vcmask 523264
        %283 = vst.msk [vmem:[%s211] sm:$0xff] %vm282, %v281
        %s284 = sand.u32 %s132, 1
        %s285 = scalar_lea.sflag [#allocation4], %s284
        %s286 = sand.u32 %s132, 1
        %s287 = smul.addr %s286, 8
        %s288 = scalar_lea.vmem [#allocation3], %s287
        // Predicated region
        $region37: #{tpu_custom_call.1} parent=35 // pred_check
          %p289 = pneg %p142
        $region38: #{tpu_custom_call.1} parent=35 // pred_check_branch
          %291 = sbr.rel (%p289) target = $region40
        $region39: #{tpu_custom_call.1} parent=35 // pred_region
          %s293 = ssub.s32 128, 128
          %294 = vsyncadd %s285, %s293
          %s295 = sadd.s32 %s24, %s23
          %s296 = smul.addr %s295, 128
          %s297 = scalar_lea.hbm %s4, %s296
          %s299 = sshll.u32 %s288, 4
          %s300 = int_to_ptr.vmem [resolvable:$true] %s299
          %302 = dma.vmem_to_hbm [thread:$0]  %s300, 128, %s297, %s285
        $region40: #{tpu_custom_call.1} parent=35 // pred_fallthru
          _
      $region36: #{tpu_custom_call.1} parent=5 // pred_fallthru
        _
      %p303 = scmp.le.s32.totalorder 2, %s14
      // Predicated region
      $region41: #{tpu_custom_call.1} parent=5 // pred_check
        %p304 = pneg %p303
      $region42: #{tpu_custom_call.1} parent=5 // pred_check_branch
        %306 = sbr.rel (%p304) target = $region44
      $region43: #{tpu_custom_call.1} parent=5 // pred_region
        %s307 = ssub.s32 %s14, 2
        // Predicated region
        $region45: #{tpu_custom_call.1} parent=43 // pred_check
          %p308 = pneg %p148
        $region46: #{tpu_custom_call.1} parent=43 // pred_check_branch
          %310 = sbr.rel (%p308) target = $region48
        $region47: #{tpu_custom_call.1} parent=43 // pred_region
          %s311 = sand.u32 %s133, 1
          %s312 = scalar_lea.sflag [#allocation4], %s311
          %s313 = sand.u32 %s133, 1
          %s314 = smul.addr %s313, 8
          %s315 = scalar_lea.vmem [#allocation3], %s314
          %316 = dma.done %s312, 128
        $region48: #{tpu_custom_call.1} parent=43 // pred_fallthru
          _
      $region44: #{tpu_custom_call.1} parent=5 // pred_fallthru
        _
    $region6: #{tpu_custom_call.1} parent=1 // loop_footer
      %s18 = sadd.s32 1, %s14
    $region7: #{tpu_custom_call.1} parent=1 // loop_footer_branch
      %13 = sbr.rel target = $region3
    $region8: #{tpu_custom_call.1} parent=1 // loop_exit
      _
    %317 = vsyncpa [#allocation4], 1
    %s318 = scalar_lea.sflag [#allocation4], 1
    %319 = vsyncpa %s318, 1

</llo_original>
